<compile_context>
chip_gen: v6e
topology: v6e:2x2x1
jax: 0.10.0
libtpu: 0.0.40
codegen_flags: <defaults>
</compile_context>

<pallas_src>
import functools

import jax
import jax.numpy as jnp
from jax.experimental import pallas as pl
from jax.experimental.pallas import tpu as pltpu


def _accuracy_kernel(logits_ref, target_ref, out_ref, acc_ref, *,
                     k, batch_size, tile_rows, tiles_per_part):
    """Process one (tile_rows, C) batch tile; accumulate #rows with target in top-k."""
    p = pl.program_id(0)          # (possibly) megacore-parallel partition axis
    t = pl.program_id(1)          # batch-tile (reduction) axis

    @pl.when(t == 0)
    def _():
        acc_ref[...] = jnp.zeros_like(acc_ref)

    # HBM streams the native dtype; upcasting bf16 -> f32 in-register keeps every
    # compare / mask in one 32-bit (8,128) layout (avoids bf16<->int32 mask repacks).
    logits = logits_ref[...].astype(jnp.float32)              # (TB, C)
    target = target_ref[...]                                  # (TB, 1) int32
    tb, c = logits.shape

    class_ids = jax.lax.broadcasted_iota(jnp.int32, (tb, c), 1)
    delta = class_ids - target            # ==0 at the target class, <0 below it

    # Target logit via one-hot select + row max; fill with -inf so a -inf target
    # logit is still recovered exactly.
    tgt_val = jnp.max(jnp.where(delta == 0, logits, jnp.float32(-jnp.inf)),
                      axis=-1, keepdims=True)                 # (TB, 1)

    # torch.topk tie-break: lower class index wins. Target is in the top-k iff
    # fewer than k classes sort strictly before it. Broadcast tgt_val once
    # (JAX does not CSE broadcast_in_dim).
    tgt_b = jnp.broadcast_to(tgt_val, (tb, c))
    before = (logits > tgt_b) | ((logits == tgt_b) & (delta < 0))
    rank = jnp.sum(before, axis=-1, keepdims=True)            # (TB, 1) int32

    # Mask rows past the true batch (boundary padding / clamped duplicate tiles).
    g = p * tiles_per_part + t                                 # global tile idx (unclamped)
    row_ids = g * tile_rows + jax.lax.broadcasted_iota(jnp.int32, (tb, 1), 0)
    valid = row_ids < batch_size

    acc_ref[...] += jnp.sum((valid & (rank < k)).astype(jnp.int32), keepdims=True)

    @pl.when(t == pl.num_programs(1) - 1)
    def _():
        # Lane-dense (1, 8, 128) partial-sum block, broadcast of the scalar count.
        out_ref[...] = jnp.zeros_like(out_ref) + acc_ref[...].astype(jnp.float32)


def _accuracy_jnp(output, target_idx, k, scale):
    """Pure-jnp reference / small-input fast path (same tie-break semantics)."""
    b, c = output.shape
    output = output.astype(jnp.float32)
    class_ids = jax.lax.broadcasted_iota(jnp.int32, (b, c), 1)
    tgt = target_idx.reshape(-1, 1).astype(jnp.int32)
    delta = class_ids - tgt
    tgt_val = jnp.max(jnp.where(delta == 0, output, jnp.float32(-jnp.inf)),
                      axis=-1, keepdims=True)
    before = (output > tgt_val) | ((output == tgt_val) & (delta < 0))
    rank = jnp.sum(before, axis=-1)
    correct = (rank < k).astype(jnp.float32)
    return (jnp.sum(correct) * (float(scale) / b)).reshape(1)


def _chip_info():
    """Return (per-core VMEM capacity bytes, device exposes multiple TensorCores)."""
    vmem_cap = None
    try:
        vmem_cap = int(pltpu.get_tpu_info().vmem_capacity_bytes)
    except Exception:
        vmem_cap = None
    kind = ""
    try:
        kind = jax.devices()[0].device_kind.lower()
    except Exception:
        kind = ""
    # Chips exposing >1 TensorCore per JAX device: v4 / v5p (megacore) and v7x.
    multi_tc = any(s in kind for s in ("v4", "v5p", "7"))
    if vmem_cap is None:
        vmem_cap = (64 if "7" in kind else 128) * 1024 * 1024
    return vmem_cap, multi_tc


def accuracy(output, target, *, topk=1, scale=1.0, block_rows=None, force_pallas=False):
    """Pallas equivalent of Accuracy(topk, scale)(output, target) -> shape (1,) f32."""
    output = jnp.asarray(output)
    target = jnp.asarray(target)

    # PyTorch branch: same shape => soft/one-hot targets, take argmax.
    if output.shape == target.shape:
        target = jnp.argmax(target, axis=-1)
    target = target.astype(jnp.int32)

    # Keep the native float dtype for the HBM stream (mem-bound on v5e/v6e).
    if output.dtype not in (jnp.dtype(jnp.float32), jnp.dtype(jnp.bfloat16)):
        output = output.astype(jnp.float32)

    b, c = output.shape
    itemsize = output.dtype.itemsize

    vmem_cap, multi_tc = _chip_info()
    small_chip = vmem_cap <= 96 * 1024 * 1024          # v7x-class: 64 MiB per TC

    # Tiny metric tensors: XLA fusion beats kernel launch + per-step grid overhead.
    bypass_bytes = (2 if small_chip else 1) * 1024 * 1024
    if not force_pallas and b * c * itemsize < bypass_bytes:
        return _accuracy_jnp(output, target, int(topk), float(scale))

    # ---- batch tiling ------------------------------------------------------
    row_align = {4: 8, 2: 16, 1: 32}.get(itemsize, 8)   # sublane alignment

    # Per-row VMEM footprint: double-buffered DMA of logits (+target) plus ~4 f32/int32
    # in-kernel temporaries of shape (tb, C) (iota, delta, masks, selected values) —
    # a safe overestimate; the Mosaic scheduler reuses buffers.
    bytes_per_row = c * (2 * itemsize + 16) + 32
    vmem_budget = (36 if small_chip else 96) * 1024 * 1024

    # Very large class counts: even one aligned row-group would overflow the budget
    # (the class dim lives in a single block). Fall back to the fused jnp path.
    # TODO(synk): a class-dim reduction axis with a running (tgt_val, rank) carry
    # would keep huge-vocab logits on the Pallas path; jnp fallback used instead.
    if row_align * bytes_per_row > vmem_budget:
        return _accuracy_jnp(output, target, int(topk), float(scale))

    if block_rows is None:
        tb = vmem_budget // bytes_per_row
        tb = max(row_align, min(8192, (tb // row_align) * row_align))
    else:
        tb = int(block_rows)
    # no point in a tile taller than the (alignment-rounded) batch
    tb = min(tb, max(row_align, ((b + row_align - 1) // row_align) * row_align))

    total_tiles = (b + tb - 1) // tb

    # Two partitions only where there really are 2 TensorCores (v4/v5p/v7x);
    # on single-TC chips the extra axis is just a serial loop + wasted DMA.
    parts = 2 if (multi_tc and total_tiles >= 2) else 1
    if parts == 2 and total_tiles % 2 == 1:
        # Re-split so both TensorCores get equal work and the clamped
        # duplicate-tile DMA on the overflow step disappears.
        tb_try = (b + total_tiles) // (total_tiles + 1)           # ceil(b / (tt+1))
        tb_try = max(row_align, ((tb_try + row_align - 1) // row_align) * row_align)
        if ((b + tb_try - 1) // tb_try) % 2 == 0:
            tb = tb_try
            total_tiles = (b + tb - 1) // tb
    tiles_per_part = (total_tiles + parts - 1) // parts
    last_tile = total_tiles - 1

    target2d = target.reshape(-1, 1)

    if parts * tiles_per_part == total_tiles:
        def tile_map(p, t):
            return (p * tiles_per_part + t, 0)
    else:
        # Clamp so the overflow step of the last partition re-reads the final tile;
        # its rows are fully masked in the kernel.
        def tile_map(p, t):
            return (jnp.minimum(p * tiles_per_part + t, last_tile), 0)

    kernel = functools.partial(
        _accuracy_kernel,
        k=int(topk), batch_size=b, tile_rows=tb, tiles_per_part=tiles_per_part)

    # Scoped VMEM: generation-aware cap, raised together with the tile budget.
    vmem_needed = tb * bytes_per_row + 2 * parts * 8 * 128 * 4 + 64 * 1024
    vmem_cap_limit = (48 if small_chip else 100) * 1024 * 1024
    vmem_limit = int(min(max(vmem_needed + 8 * 1024 * 1024, 16 * 1024 * 1024),
                         vmem_cap_limit))

    # TODO(synk): on v7x verify the leading "parallel" axis shards across both
    # TensorCores (xprof); if not, switch it to pltpu.CORE_PARALLEL / a core_map split.
    partials = pl.pallas_call(
        kernel,
        out_shape=jax.ShapeDtypeStruct((parts, 8, 128), jnp.float32),
        grid_spec=pltpu.PrefetchScalarGridSpec(
            num_scalar_prefetch=0,
            grid=(parts, tiles_per_part),
            in_specs=[
                pl.BlockSpec((tb, c), tile_map),      # logits: full class dim per block
                pl.BlockSpec((tb, 1), tile_map),      # targets: (TB, 1) int32 stream
            ],
            out_specs=pl.BlockSpec((1, 8, 128), lambda p, t: (p, 0, 0)),
            scratch_shapes=[pltpu.VMEM((1, 1), jnp.int32)],
        ),
        compiler_params=pltpu.CompilerParams(
            dimension_semantics=("parallel", "arbitrary"),
            vmem_limit_bytes=vmem_limit,
        ),
    )(output, target2d)

    count = jnp.sum(partials[:, 0, 0])
    return (count * (float(scale) / b)).reshape(1)


if __name__ == "__main__":
    key = jax.random.PRNGKey(0)
    k1, k2, k3, k4 = jax.random.split(key, 4)

    # Case 1: f32, batch not a multiple of the tile, top-5, scale=2.
    B1, C1 = 37, 256
    logits1 = jax.random.normal(k1, (B1, C1), dtype=jnp.float32)
    target1 = jax.random.randint(k2, (B1,), 0, C1, dtype=jnp.int32)
    got1 = accuracy(logits1, target1, topk=5, scale=2.0, force_pallas=True)
    ref1 = _accuracy_jnp(logits1, target1, 5, 2.0)
    jax.block_until_ready(got1)
    assert jnp.allclose(got1, ref1, atol=1e-6), (got1, ref1)

    # Case 2: bf16, multi-tile grid (exercises accumulator + masked tail), top-3.
    B2, C2 = 100, 128
    logits2 = jax.random.normal(k3, (B2, C2), dtype=jnp.float32).astype(jnp.bfloat16)
    target2 = jax.random.randint(k4, (B2,), 0, C2, dtype=jnp.int32)
    got2 = accuracy(logits2, target2, topk=3, scale=1.0,
                    block_rows=16, force_pallas=True)
    ref2 = _accuracy_jnp(logits2, target2, 3, 1.0)
    jax.block_until_ready(got2)
    assert jnp.allclose(got2, ref2, atol=1e-6), (got2, ref2)

    # Case 3: one-hot target branch; tiny-input bypass vs forced Pallas path agree.
    onehot = jax.nn.one_hot(target1, C1, dtype=jnp.float32)
    got3 = accuracy(logits1, onehot, topk=1, scale=1.0)                 # jnp bypass
    got3p = accuracy(logits1, onehot, topk=1, scale=1.0, force_pallas=True)
    jax.block_until_ready((got3, got3p))
    assert jnp.allclose(got3, got3p, atol=1e-6), (got3, got3p)

    print("KERNEL_OK")
</pallas_src>

<mosaic_0001>
module attributes {stable_mosaic.version = 11 : i64} {
  func.func @_accuracy_kernel(%arg0: i32, %arg1: i32, %arg2: memref<40x256xf32, #tpu.memory_space<vmem>>, %arg3: memref<40x1xi32, #tpu.memory_space<vmem>>, %arg4: memref<1x8x128xf32, #tpu.memory_space<vmem>>, %arg5: memref<1x1xi32, #tpu.memory_space<vmem>>) attributes {dimension_semantics = [#tpu.dimension_semantics<parallel>, #tpu.dimension_semantics<arbitrary>], iteration_bounds = array<i64: 1, 1>, scalar_prefetch = 0 : i64, scratch_operands = 1 : i64, tpu.core_type = #tpu.core_type<tc>, window_params = [{transform_indices = @transform_0, window_bounds = array<i64: 40, 256>}, {transform_indices = @transform_1, window_bounds = array<i64: 40, 1>}, {transform_indices = @transform_2, window_bounds = array<i64: 1, 8, 128>}]} {
    %c0_i32 = arith.constant 0 : i32
    %0 = arith.cmpi eq, %arg1, %c0_i32 : i32
    %1 = arith.extui %0 : i1 to i32
    %c0_i32_0 = arith.constant 0 : i32
    %2 = arith.cmpi ne, %1, %c0_i32_0 : i32
    scf.if %2 {
      %c0_i32_15 = arith.constant 0 : i32
      %48 = vector.broadcast %c0_i32_15 : i32 to vector<1x1xi32>
      %c0_16 = arith.constant 0 : index
      %c0_17 = arith.constant 0 : index
      %49 = vector.load %arg5[%c0_16, %c0_17] : memref<1x1xi32, #tpu.memory_space<vmem>>, vector<1x1xi32>
      tpu.vector_store %arg5[%c0_16, %c0_17], %48 {strides = array<i32>} : memref<1x1xi32, #tpu.memory_space<vmem>>, vector<1x1xi32>,
    } else {
    }
    %c0 = arith.constant 0 : index
    %c0_1 = arith.constant 0 : index
    %3 = vector.load %arg2[%c0, %c0_1] : memref<40x256xf32, #tpu.memory_space<vmem>>, vector<40x256xf32>
    %c0_2 = arith.constant 0 : index
    %c0_3 = arith.constant 0 : index
    %4 = vector.load %arg3[%c0_2, %c0_3] : memref<40x1xi32, #tpu.memory_space<vmem>>, vector<40x1xi32>
    %5 = tpu.iota {dimensions = array<i32: 1>} : vector<40x256xi32>
    %6 = vector.broadcast %4 : vector<40x1xi32> to vector<40x256xi32>
    %7 = arith.subi %5, %6 : vector<40x256xi32>
    %c0_i32_4 = arith.constant 0 : i32
    %8 = vector.broadcast %c0_i32_4 : i32 to vector<40x256xi32>
    %9 = arith.cmpi eq, %7, %8 : vector<40x256xi32>
    %cst = arith.constant 0xFF800000 : f32
    %10 = vector.broadcast %cst : f32 to vector<40x256xf32>
    %11 = arith.select %9, %3, %10 : vector<40x256xi1>, vector<40x256xf32>
    %cst_5 = arith.constant dense<0xFF800000> : vector<40xf32>
    %12 = vector.multi_reduction <maximumf>, %11, %cst_5 [1] : vector<40x256xf32> to vector<40xf32>
    %13 = vector.shape_cast %12 : vector<40xf32> to vector<40x1xf32>
    %14 = vector.shape_cast %13 : vector<40x1xf32> to vector<40x1xf32>
    %15 = vector.broadcast %14 : vector<40x1xf32> to vector<40x256xf32>
    %16 = arith.cmpf ogt, %3, %15 : vector<40x256xf32>
    %17 = arith.cmpf oeq, %3, %15 : vector<40x256xf32>
    %c0_i32_6 = arith.constant 0 : i32
    %18 = vector.broadcast %c0_i32_6 : i32 to vector<40x256xi32>
    %19 = arith.cmpi slt, %7, %18 : vector<40x256xi32>
    %20 = arith.andi %17, %19 : vector<40x256xi1>
    %21 = arith.ori %16, %20 : vector<40x256xi1>
    %22 = arith.extui %21 : vector<40x256xi1> to vector<40x256xi32>
    %cst_7 = arith.constant dense<0> : vector<40xi32>
    %23 = vector.multi_reduction <add>, %22, %cst_7 [1] : vector<40x256xi32> to vector<40xi32>
    %24 = vector.shape_cast %23 : vector<40xi32> to vector<40x1xi32>
    %c1_i32 = arith.constant 1 : i32
    %25 = arith.muli %arg0, %c1_i32 : i32
    %26 = arith.addi %25, %arg1 : i32
    %c40_i32 = arith.constant 40 : i32
    %27 = arith.muli %26, %c40_i32 : i32
    %28 = tpu.iota {dimensions = array<i32: 0>} : vector<40x1xi32>
    %29 = vector.broadcast %27 : i32 to vector<40x1xi32>
    %30 = arith.addi %29, %28 : vector<40x1xi32>
    %c37_i32 = arith.constant 37 : i32
    %31 = vector.broadcast %c37_i32 : i32 to vector<40x1xi32>
    %32 = arith.cmpi slt, %30, %31 : vector<40x1xi32>
    %c0_8 = arith.constant 0 : index
    %c0_9 = arith.constant 0 : index
    %33 = vector.load %arg5[%c0_8, %c0_9] : memref<1x1xi32, #tpu.memory_space<vmem>>, vector<1x1xi32>
    %c5_i32 = arith.constant 5 : i32
    %34 = vector.broadcast %c5_i32 : i32 to vector<40x1xi32>
    %35 = arith.cmpi slt, %24, %34 : vector<40x1xi32>
    %36 = arith.andi %32, %35 : vector<40x1xi1>
    %37 = arith.extui %36 : vector<40x1xi1> to vector<40x1xi32>
    %38 = vector.shape_cast %37 : vector<40x1xi32> to vector<1x40x1xi32>
    %cst_10 = arith.constant dense<0> : vector<1xi32>
    %39 = vector.multi_reduction <add>, %38, %cst_10 [1, 2] : vector<1x40x1xi32> to vector<1xi32>
    %40 = vector.shape_cast %39 : vector<1xi32> to vector<1x1x1xi32>
    %41 = vector.extract %40[0, 0, 0] : i32 from vector<1x1x1xi32>
    %42 = vector.broadcast %41 : i32 to vector<1x1xi32>
    %43 = arith.addi %33, %42 : vector<1x1xi32>
    %c0_11 = arith.constant 0 : index
    %c0_12 = arith.constant 0 : index
    %44 = vector.load %arg5[%c0_11, %c0_12] : memref<1x1xi32, #tpu.memory_space<vmem>>, vector<1x1xi32>
    tpu.vector_store %arg5[%c0_11, %c0_12], %43 {strides = array<i32>} : memref<1x1xi32, #tpu.memory_space<vmem>>, vector<1x1xi32>,
    %c0_i32_13 = arith.constant 0 : i32
    %45 = arith.cmpi eq, %arg1, %c0_i32_13 : i32
    %46 = arith.extui %45 : i1 to i32
    %c0_i32_14 = arith.constant 0 : i32
    %47 = arith.cmpi ne, %46, %c0_i32_14 : i32
    scf.if %47 {
      %cst_15 = arith.constant 0.000000e+00 : f32
      %48 = vector.broadcast %cst_15 : f32 to vector<1x8x128xf32>
      %c0_16 = arith.constant 0 : index
      %c0_17 = arith.constant 0 : index
      %49 = vector.load %arg5[%c0_16, %c0_17] : memref<1x1xi32, #tpu.memory_space<vmem>>, vector<1x1xi32>
      %50 = arith.sitofp %49 : vector<1x1xi32> to vector<1x1xf32>
      %51 = vector.shape_cast %50 : vector<1x1xf32> to vector<1x1x1xf32>
      %52 = vector.broadcast %51 : vector<1x1x1xf32> to vector<1x8x128xf32>
      %53 = arith.addf %48, %52 : vector<1x8x128xf32>
      %c0_18 = arith.constant 0 : index
      %c0_19 = arith.constant 0 : index
      %c0_20 = arith.constant 0 : index
      %54 = vector.load %arg4[%c0_18, %c0_19, %c0_20] : memref<1x8x128xf32, #tpu.memory_space<vmem>>, vector<1x8x128xf32>
      tpu.vector_store %arg4[%c0_18, %c0_19, %c0_20], %53 {strides = array<i32>} : memref<1x8x128xf32, #tpu.memory_space<vmem>>, vector<1x8x128xf32>,
    } else {
    }
    return
  }
  func.func @transform_0(%arg0: i32, %arg1: i32) -> (i32, i32) {
    %c1_i32 = arith.constant 1 : i32
    %0 = arith.muli %arg0, %c1_i32 : i32
    %1 = arith.addi %0, %arg1 : i32
    %c0_i32 = arith.constant 0 : i32
    %c0_i32_0 = arith.constant 0 : i32
    return %1, %c0_i32 : i32, i32
  }
  func.func @transform_1(%arg0: i32, %arg1: i32) -> (i32, i32) {
    %c1_i32 = arith.constant 1 : i32
    %0 = arith.muli %arg0, %c1_i32 : i32
    %1 = arith.addi %0, %arg1 : i32
    %c0_i32 = arith.constant 0 : i32
    %c0_i32_0 = arith.constant 0 : i32
    return %1, %c0_i32 : i32, i32
  }
  func.func @transform_2(%arg0: i32, %arg1: i32) -> (i32, i32, i32) {
    %c0_i32 = arith.constant 0 : i32
    %c0_i32_0 = arith.constant 0 : i32
    %c0_i32_1 = arith.constant 0 : i32
    return %arg0, %c0_i32, %c0_i32_0 : i32, i32, i32
  }
}

</mosaic_0001>

<llo_original>
// kernel: tpu_custom_call.1
$region0: #{tpu_custom_call.1}
  #allocation0 [shape = 'u32[]', space=smem, size = 0x4, offset = 0x4, fixed_abs, tag = 'smem constant byte address 0x4 - core index']
  #allocation1 [shape = 'u32[144,128]{1,0:T(1,128)}', space=vmem, size = 0x12000, scoped, tag = 'internal scratch']
  #allocation2 [shape = 's32[1,1]{1,0:T(1,128)}', space=vmem, size = 0x200, scoped, tag = 'scratch operand']
  %s0 = inlined_call_operand.hbm [shape: f32[37,256], index: 0, kind: input, shape index: {}]
  %s1 = inlined_call_operand.vmem [shape: s32[37,1], index: 1, kind: input, shape index: {}]
  %s2 = inlined_call_operand.hbm [shape: f32[1,8,128], index: 2, kind: output, shape index: {}]
  %s3 = sld [smem:[#allocation0]]
  $region30: #{tpu_custom_call.1} parent=0
    _
  %s5 = ssub.s32 1, %s3
  %s6 = scalar_select 0, %s5, %s3
  $region1: #{tpu_custom_call.1} parent=0
    #allocation3 [shape = 'u8[40960]{0}', space=vmem, size = 0xa000, scoped, tag = 'input window, operand 0, single buffered']
    #allocation4 [shape = 's32[1]{0}', space=sflag, size = 0x4, scoped, tag = 'scoped memory for tpu_custom_call.1']
    #allocation5 [shape = 's32[1]{0}', space=sflag, size = 0x4, scoped, tag = 'scoped memory for tpu_custom_call.1']
    #allocation6 [shape = 'u8[4096]{0}', space=vmem, size = 0x1000, scoped, tag = 'output window, operand 0, single buffered']
    %7 = vsyncpa [#allocation4], 0
    %8 = vsyncpa [#allocation5], 0
    // Predicated region
    $region2: #{tpu_custom_call.1} parent=1 // pred_check
      _
    $region3: #{tpu_custom_call.1} parent=1 // pred_check_branch
      %10 = sbr.rel (0) target = $region5
    $region4: #{tpu_custom_call.1} parent=1 // pred_region
      %s11 = sadd.s32 0, 0
      %s12 = smul.u32 5, %s11
      %s14 = ssub.s32 1280, 1280
      %15 = vsyncadd [#allocation4], %s14
      %s16 = smul.addr %s12, 2
      %s17 = smul.addr %s16, 128
      %s18 = scalar_lea.hbm %s0, %s17
      %s19 = sshll.u32 [#allocation3], 4
      %s20 = int_to_ptr.vmem [resolvable:$true] %s19
      %25 = dma.hbm_to_vmem [thread:$0]  %s18, 1280, %s20, [#allocation4], 256, 256, 16
    $region5: #{tpu_custom_call.1} parent=1 // pred_fallthru
      _
    // Predicated region
    $region6: #{tpu_custom_call.1} parent=1 // pred_check
      _
    $region7: #{tpu_custom_call.1} parent=1 // pred_check_branch
      %27 = sbr.rel (0) target = $region9
    $region8: #{tpu_custom_call.1} parent=1 // pred_region
      %s28 = sadd.s32 0, 0
      %s29 = smul.u32 5, %s28
      %p30 = scmp.lt.s32.totalorder %s29, 4
      %s31 = scalar_select %p30, %s29, 4
      %s32 = smul.addr %s31, 8
      %s33 = scalar_lea.vmem %s1, %s32
      %s34 = sadd.s32 0, 0
      %s35 = smul.u32 5, %s34
    $region9: #{tpu_custom_call.1} parent=1 // pred_fallthru
      _
    // Predicated region
    $region10: #{tpu_custom_call.1} parent=1 // pred_check
      _
    $region11: #{tpu_custom_call.1} parent=1 // pred_check_branch
      %37 = sbr.rel (0) target = $region13
    $region12: #{tpu_custom_call.1} parent=1 // pred_region
      %38 = dma.done [#allocation4], 1280
    $region13: #{tpu_custom_call.1} parent=1 // pred_fallthru
      _
    %s39 = sadd.s32 0, 0
    %s40 = smul.u32 5, %s39
    %p41 = scmp.lt.s32.totalorder %s40, 4
    %s42 = scalar_select %p41, %s40, 4
    %s43 = smul.addr %s42, 8
    %s44 = scalar_lea.vmem %s1, %s43
    %s45 = sadd.s32 0, 0
    %s46 = smul.u32 5, %s45
    %s47 = sadd.s32 0, 0
    %s48 = smul.u32 5, %s47
    %p49 = scmp.lt.s32.totalorder %s48, 4
    %s50 = scalar_select %p49, %s48, 4
    %s51 = smul.addr %s50, 8
    %s52 = scalar_lea.vmem %s1, %s51
    %s53 = sadd.s32 0, 0
    %s54 = smul.u32 5, %s53
    %p55 = scmp.eq.s32.totalorder 0, 0
    // Predicated region
    $region14: #{tpu_custom_call.1} parent=1 // pred_check
      %p56 = pneg %p55
    $region15: #{tpu_custom_call.1} parent=1 // pred_check_branch
      %58 = sbr.rel (%p56) target = $region17
    $region16: #{tpu_custom_call.1} parent=1 // pred_region
      %vm59 = vcmask 0
      %60 = vst.msk [vmem:[#allocation2] sm:$0x1] %vm59, 0
    $region17: #{tpu_custom_call.1} parent=1 // pred_fallthru
      _
    %v61 = vld [vmem:[#allocation3] sm:$0xff]
    %v62 = vld [vmem:[#allocation3 + $0x8] sm:$0xff]
    %v63 = vld [vmem:[#allocation3 + $0x10] sm:$0xff]
    %v64 = vld [vmem:[#allocation3 + $0x18] sm:$0xff]
    %v65 = vld [vmem:[#allocation3 + $0x20] sm:$0xff]
    %v66 = vld [vmem:[#allocation3 + $0x28] sm:$0xff]
    %v67 = vld [vmem:[#allocation3 + $0x30] sm:$0xff]
    %v68 = vld [vmem:[#allocation3 + $0x38] sm:$0xff]
    %v69 = vld [vmem:[#allocation3 + $0x40] sm:$0xff]
    %v70 = vld [vmem:[#allocation3 + $0x48] sm:$0xff]
    %v71 = vld [vmem:[%s52] sm:$0xff]
    %v72 = vld [vmem:[%s52 + $0x8] sm:$0xff]
    %v73 = vld [vmem:[%s52 + $0x10] sm:$0xff]
    %v74 = vld [vmem:[%s52 + $0x18] sm:$0xff]
    %v75 = vld [vmem:[%s52 + $0x20] sm:$0xff]
    %v76 = vlaneseq
    %v77 = vand.u32 %v76, 127
    %v78 = vadd.s32 %v77, 128
    %79 = vset.pattern.permute.xlu0 0
    %80 = vperm.xlu0 %79, %v71
    %v81 = vpop.permute.xlu0 %80
    %82 = vset.pattern.permute.xlu0 0
    %83 = vperm.xlu0 %82, %v72
    %v84 = vpop.permute.xlu0 %83
    %85 = vset.pattern.permute.xlu0 0
    %86 = vperm.xlu0 %85, %v73
    %v87 = vpop.permute.xlu0 %86
    %88 = vset.pattern.permute.xlu0 0
    %89 = vperm.xlu0 %88, %v74
    %v90 = vpop.permute.xlu0 %89
    %91 = vset.pattern.permute.xlu0 0
    %92 = vperm.xlu0 %91, %v75
    %v93 = vpop.permute.xlu0 %92
    %v94 = vsub.s32 %v77, %v81
    %v95 = vsub.s32 %v78, %v81
    %v96 = vsub.s32 %v77, %v84
    %v97 = vsub.s32 %v78, %v84
    %v98 = vsub.s32 %v77, %v87
    %v99 = vsub.s32 %v78, %v87
    %v100 = vsub.s32 %v77, %v90
    %v101 = vsub.s32 %v78, %v90
    %v102 = vsub.s32 %v77, %v93
    %v103 = vsub.s32 %v78, %v93
    %vm104 = vcmp.eq.s32.totalorder %v94, 0
    %vm105 = vcmp.eq.s32.totalorder %v95, 0
    %vm106 = vcmp.eq.s32.totalorder %v96, 0
    %vm107 = vcmp.eq.s32.totalorder %v97, 0
    %vm108 = vcmp.eq.s32.totalorder %v98, 0
    %vm109 = vcmp.eq.s32.totalorder %v99, 0
    %vm110 = vcmp.eq.s32.totalorder %v100, 0
    %vm111 = vcmp.eq.s32.totalorder %v101, 0
    %vm112 = vcmp.eq.s32.totalorder %v102, 0
    %vm113 = vcmp.eq.s32.totalorder %v103, 0
    %v114 = vsel %vm104, %v61, -inf
    %v115 = vsel %vm105, %v62, -inf
    %v116 = vsel %vm106, %v63, -inf
    %v117 = vsel %vm107, %v64, -inf
    %v118 = vsel %vm108, %v65, -inf
    %v119 = vsel %vm109, %v66, -inf
    %v120 = vsel %vm110, %v67, -inf
    %v121 = vsel %vm111, %v68, -inf
    %v122 = vsel %vm112, %v69, -inf
    %v123 = vsel %vm113, %v70, -inf
    %v124 = vmax.f32 %v114, %v115
    %125 = vmax.xlane.f32.xlu0 %v124
    %v126 = vpop.xlane.xlu0 %125
    %v127 = vmax.f32 %v116, %v117
    %128 = vmax.xlane.f32.xlu0 %v127
    %v129 = vpop.xlane.xlu0 %128
    %v130 = vmax.f32 %v118, %v119
    %131 = vmax.xlane.f32.xlu0 %v130
    %v132 = vpop.xlane.xlu0 %131
    %v133 = vmax.f32 %v120, %v121
    %134 = vmax.xlane.f32.xlu0 %v133
    %v135 = vpop.xlane.xlu0 %134
    %v136 = vmax.f32 %v122, %v123
    %137 = vmax.xlane.f32.xlu0 %v136
    %v138 = vpop.xlane.xlu0 %137
    %vm139 = vcmp.gt.f32.partialorder %v61, %v126
    %vm140 = vcmp.gt.f32.partialorder %v62, %v126
    %vm141 = vcmp.gt.f32.partialorder %v63, %v129
    %vm142 = vcmp.gt.f32.partialorder %v64, %v129
    %vm143 = vcmp.gt.f32.partialorder %v65, %v132
    %vm144 = vcmp.gt.f32.partialorder %v66, %v132
    %vm145 = vcmp.gt.f32.partialorder %v67, %v135
    %vm146 = vcmp.gt.f32.partialorder %v68, %v135
    %vm147 = vcmp.gt.f32.partialorder %v69, %v138
    %vm148 = vcmp.gt.f32.partialorder %v70, %v138
    %vm149 = vcmp.eq.f32.partialorder %v61, %v126
    %vm150 = vcmp.eq.f32.partialorder %v62, %v126
    %vm151 = vcmp.eq.f32.partialorder %v63, %v129
    %vm152 = vcmp.eq.f32.partialorder %v64, %v129
    %vm153 = vcmp.eq.f32.partialorder %v65, %v132
    %vm154 = vcmp.eq.f32.partialorder %v66, %v132
    %vm155 = vcmp.eq.f32.partialorder %v67, %v135
    %vm156 = vcmp.eq.f32.partialorder %v68, %v135
    %vm157 = vcmp.eq.f32.partialorder %v69, %v138
    %vm158 = vcmp.eq.f32.partialorder %v70, %v138
    %vm159 = vcmp.lt.s32.totalorder %v94, 0
    %vm160 = vcmp.lt.s32.totalorder %v95, 0
    %vm161 = vcmp.lt.s32.totalorder %v96, 0
    %vm162 = vcmp.lt.s32.totalorder %v97, 0
    %vm163 = vcmp.lt.s32.totalorder %v98, 0
    %vm164 = vcmp.lt.s32.totalorder %v99, 0
    %vm165 = vcmp.lt.s32.totalorder %v100, 0
    %vm166 = vcmp.lt.s32.totalorder %v101, 0
    %vm167 = vcmp.lt.s32.totalorder %v102, 0
    %vm168 = vcmp.lt.s32.totalorder %v103, 0
    %vm169 = vmand %vm149, %vm159
    %vm170 = vmand %vm150, %vm160
    %vm171 = vmand %vm151, %vm161
    %vm172 = vmand %vm152, %vm162
    %vm173 = vmand %vm153, %vm163
    %vm174 = vmand %vm154, %vm164
    %vm175 = vmand %vm155, %vm165
    %vm176 = vmand %vm156, %vm166
    %vm177 = vmand %vm157, %vm167
    %vm178 = vmand %vm158, %vm168
    %vm179 = vmor %vm139, %vm169
    %vm180 = vmor %vm140, %vm170
    %vm181 = vmor %vm141, %vm171
    %vm182 = vmor %vm142, %vm172
    %vm183 = vmor %vm143, %vm173
    %vm184 = vmor %vm144, %vm174
    %vm185 = vmor %vm145, %vm175
    %vm186 = vmor %vm146, %vm176
    %vm187 = vmor %vm147, %vm177
    %vm188 = vmor %vm148, %vm178
    %v189 = vsel %vm179, 1, 0
    %v190 = vsel %vm180, 1, 0
    %v191 = vsel %vm181, 1, 0
    %v192 = vsel %vm182, 1, 0
    %v193 = vsel %vm183, 1, 0
    %v194 = vsel %vm184, 1, 0
    %v195 = vsel %vm185, 1, 0
    %v196 = vsel %vm186, 1, 0
    %v197 = vsel %vm187, 1, 0
    %v198 = vsel %vm188, 1, 0
    %v199 = vadd.s32 %v189, %v190
    %v200 = vand.u32 %v199, 65535
    %v201 = vshrl.u32 %v199, 16
    %v202 = vcvt.s32.f32 %v200
    %v203 = vcvt.s32.f32 %v201
    %204 = vadd.xlane.f32.xlu0 %v202
    %v205 = vpop.xlane.xlu0 %204
    %206 = vadd.xlane.f32.xlu0 %v203
    %v207 = vpop.xlane.xlu0 %206
    %v208 = vcvt.f32.s32 %v205
    %v209 = vcvt.f32.s32 %v207
    %v210 = vshll.u32 %v209, 16
    %v211 = vadd.s32 %v210, %v208
    %v212 = vadd.s32 %v191, %v192
    %v213 = vand.u32 %v212, 65535
    %v214 = vshrl.u32 %v212, 16
    %v215 = vcvt.s32.f32 %v213
    %v216 = vcvt.s32.f32 %v214
    %217 = vadd.xlane.f32.xlu0 %v215
    %v218 = vpop.xlane.xlu0 %217
    %219 = vadd.xlane.f32.xlu0 %v216
    %v220 = vpop.xlane.xlu0 %219
    %v221 = vcvt.f32.s32 %v218
    %v222 = vcvt.f32.s32 %v220
    %v223 = vshll.u32 %v222, 16
    %v224 = vadd.s32 %v223, %v221
    %v225 = vadd.s32 %v193, %v194
    %v226 = vand.u32 %v225, 65535
    %v227 = vshrl.u32 %v225, 16
    %v228 = vcvt.s32.f32 %v226
    %v229 = vcvt.s32.f32 %v227
    %230 = vadd.xlane.f32.xlu0 %v228
    %v231 = vpop.xlane.xlu0 %230
    %232 = vadd.xlane.f32.xlu0 %v229
    %v233 = vpop.xlane.xlu0 %232
    %v234 = vcvt.f32.s32 %v231
    %v235 = vcvt.f32.s32 %v233
    %v236 = vshll.u32 %v235, 16
    %v237 = vadd.s32 %v236, %v234
    %v238 = vadd.s32 %v195, %v196
    %v239 = vand.u32 %v238, 65535
    %v240 = vshrl.u32 %v238, 16
    %v241 = vcvt.s32.f32 %v239
    %v242 = vcvt.s32.f32 %v240
    %243 = vadd.xlane.f32.xlu0 %v241
    %v244 = vpop.xlane.xlu0 %243
    %245 = vadd.xlane.f32.xlu0 %v242
    %v246 = vpop.xlane.xlu0 %245
    %v247 = vcvt.f32.s32 %v244
    %v248 = vcvt.f32.s32 %v246
    %v249 = vshll.u32 %v248, 16
    %v250 = vadd.s32 %v249, %v247
    %v251 = vadd.s32 %v197, %v198
    %v252 = vand.u32 %v251, 65535
    %v253 = vshrl.u32 %v251, 16
    %v254 = vcvt.s32.f32 %v252
    %v255 = vcvt.s32.f32 %v253
    %256 = vadd.xlane.f32.xlu0 %v254
    %v257 = vpop.xlane.xlu0 %256
    %258 = vadd.xlane.f32.xlu0 %v255
    %v259 = vpop.xlane.xlu0 %258
    %v260 = vcvt.f32.s32 %v257
    %v261 = vcvt.f32.s32 %v259
    %v262 = vshll.u32 %v261, 16
    %v263 = vadd.s32 %v262, %v260
    %s264 = sadd.s32 0, 0
    %s265 = smul.u32 %s264, 40
    %v266 = vlaneseq
    %v267 = vshrl.u32 %v266, 7
    %v268 = vadd.s32 %v267, 8
    %v269 = vadd.s32 %v267, 16
    %v270 = vadd.s32 %v267, 24
    %v271 = vadd.s32 %v267, 32
    %v272 = vstv %s265
    %v273 = vadd.s32 %v272, %v267
    %v274 = vadd.s32 %v272, %v268
    %v275 = vadd.s32 %v272, %v269
    %v276 = vadd.s32 %v272, %v270
    %v277 = vadd.s32 %v272, %v271
    %vm278 = vcmp.lt.s32.totalorder %v273, 37
    %vm279 = vcmp.lt.s32.totalorder %v274, 37
    %vm280 = vcmp.lt.s32.totalorder %v275, 37
    %vm281 = vcmp.lt.s32.totalorder %v276, 37
    %vm282 = vcmp.lt.s32.totalorder %v277, 37
    %v283 = vld [vmem:[#allocation2] sm:$0x1]
    %vm284 = vcmp.lt.s32.totalorder %v211, 5
    %vm285 = vcmp.lt.s32.totalorder %v224, 5
    %vm286 = vcmp.lt.s32.totalorder %v237, 5
    %vm287 = vcmp.lt.s32.totalorder %v250, 5
    %vm288 = vcmp.lt.s32.totalorder %v263, 5
    %vm289 = vmand %vm278, %vm284
    %vm290 = vmand %vm279, %vm285
    %vm291 = vmand %vm280, %vm286
    %vm292 = vmand %vm281, %vm287
    %vm293 = vmand %vm282, %vm288
    %v294 = vsel %vm289, 1, 0
    %v295 = vsel %vm290, 1, 0
    %v296 = vsel %vm291, 1, 0
    %v297 = vsel %vm292, 1, 0
    %v298 = vsel %vm293, 1, 0
    %v299 = vadd.s32 %v294, %v298
    %v300 = vadd.s32 %v299, %v295
    %v301 = vadd.s32 %v296, %v297
    %v302 = vadd.s32 %v300, %v301
    %v303 = vrot.slane %v302, 4
    %v304 = vadd.s32 %v302, %v303
    %v305 = vrot.slane %v304, 2
    %v306 = vadd.s32 %v304, %v305
    %v307 = vrot.slane %v306, 1
    %v308 = vadd.s32 %v306, %v307
    %s309 = vtos %v308
    %v310 = vstv %s309
    %v311 = vadd.s32 %v283, %v310
    %vm312 = vcmask 0
    %313 = vst.msk [vmem:[#allocation2] sm:$0x1] %vm312, %v311
    // Predicated region
    $region18: #{tpu_custom_call.1} parent=1 // pred_check
      %p314 = pneg %p55
    $region19: #{tpu_custom_call.1} parent=1 // pred_check_branch
      %316 = sbr.rel (%p314) target = $region21
    $region20: #{tpu_custom_call.1} parent=1 // pred_region
      %v317 = vld [vmem:[#allocation2] sm:$0x1]
      %v318 = vcvt.s32.f32 %v317
      %v320 = vlaneseq
      %v321 = vshrl.u32 %v320, 7
      %v322 = vsub.s32 0, %v321
      %v323 = vrot.slane %v318, %v322
      %324 = vset.pattern.permute.xlu0 0
      %325 = vperm.xlu0 %324, %v323
      %v326 = vpop.permute.xlu0 %325
      %v328 = vadd.f32 %v326, 0.0
      %329 = vst [vmem:[#allocation6] sm:$0xff] %v328
    $region21: #{tpu_custom_call.1} parent=1 // pred_fallthru
      _
    // Predicated region
    $region22: #{tpu_custom_call.1} parent=1 // pred_check
      _
    $region23: #{tpu_custom_call.1} parent=1 // pred_check_branch
      %331 = sbr.rel (0) target = $region25
    $region24: #{tpu_custom_call.1} parent=1 // pred_region
      %s333 = ssub.s32 128, 128
      %334 = vsyncadd [#allocation5], %s333
      %s336 = sshll.u32 [#allocation6], 4
      %s337 = int_to_ptr.vmem [resolvable:$true] %s336
      %339 = dma.vmem_to_hbm [thread:$0]  %s337, 128, %s2, [#allocation5]
    $region25: #{tpu_custom_call.1} parent=1 // pred_fallthru
      _
    // Predicated region
    $region26: #{tpu_custom_call.1} parent=1 // pred_check
      _
    $region27: #{tpu_custom_call.1} parent=1 // pred_check_branch
      %341 = sbr.rel (0) target = $region29
    $region28: #{tpu_custom_call.1} parent=1 // pred_region
      %342 = dma.done [#allocation5], 128
    $region29: #{tpu_custom_call.1} parent=1 // pred_fallthru
      _
    %343 = vsyncpa [#allocation4], 1
    %344 = vsyncpa [#allocation5], 1

</llo_original>
